<compile_context>
chip_gen: v6e
topology: v6e:2x2x1
jax: 0.10.0
libtpu: 0.0.40
codegen_flags: <defaults>
</compile_context>

<pallas_src>
import functools

import jax
import jax.numpy as jnp
from jax import lax
from jax.experimental import pallas as pl
from jax.experimental.pallas import tpu as pltpu

_LANE = 128


def _round_up(n, m):
    return ((n + m - 1) // m) * m


def _round_down(n, m):
    return (n // m) * m


def _disc_kernel(x_ref, w1_ref, b1_ref, w2_ref, b2_ref, o_ref):
    # x_ref  : (TB, D)  input tile in native (batch, feature) layout
    # w1_ref : (H, D)   first-layer weight (torch layout [out, in]), resident
    # b1_ref : (H, 1)   first-layer bias (column -> broadcasts over lanes)
    # w2_ref : (H, 1)   second-layer weight as a column
    # b2_ref : (1, 1)   second-layer bias, scalar in SMEM
    # o_ref  : (1, TB)  sigmoid output, batch on lanes (unmasked stores)

    # Layer 1 on the MXU, contracting over D of both operands:
    #   (H, D) . (TB, D)^T -> (H, TB), fp32 accumulate.  Batch lands on lanes.
    hT = lax.dot_general(
        w1_ref[...], x_ref[...],
        dimension_numbers=(((1,), (1,)), ((), ())),
        preferred_element_type=jnp.float32,
    )
    hT = hT + b1_ref[...]
    # LeakyReLU(0.2): single vmax after the scalar multiply.
    hT = jnp.maximum(hT, 0.2 * hT)
    # Layer 2 (single output unit): VPU multiply + sublane (XLU) reduction
    # instead of a >99%-padded N=1 MXU push.
    logits = jnp.sum(hT * w2_ref[...], axis=0, keepdims=True) + b2_ref[0, 0]
    # Exact sigmoid (EUP exp + one divide) -- free under the DMA, keeps tight
    # agreement with the reference.
    o_ref[...] = (1.0 / (1.0 + jnp.exp(-logits))).astype(o_ref.dtype)


@functools.partial(jax.jit, static_argnames=("tile_b",))
def discriminator_forward(x, w1, b1, w2, b2, *, tile_b=None):
    """sigmoid(leaky_relu(x @ W1.T + b1, 0.2) @ W2.T + b2)

    x  : (B, D) float32
    w1 : (H, D), b1 : (H,)   -- torch nn.Linear layout (H = D // 4)
    w2 : (1, H), b2 : (1,)
    Returns (B, 1) float32.
    """
    B, D = x.shape
    H = w1.shape[0]

    B_lane = _round_up(B, _LANE)
    if tile_b is None:
        # Byte budget ~8 MiB of x per tile (double-buffered ~16 MiB VMEM,
        # comfortably under the 32 MiB default scoped limit on v5e/v6e/v7x).
        budget_rows = max(_LANE,
                          _round_down((8 << 20) // (D * x.dtype.itemsize), _LANE))
        tile_b = min(B_lane, budget_rows)
        # Keep >= 2 grid steps when possible so the "parallel" batch axis
        # shards across both TensorCores on v7x (and pipelines everywhere).
        if B_lane >= 2 * _LANE:
            tile_b = min(tile_b, max(_LANE, _round_down(B_lane // 2, _LANE)))
    else:
        assert tile_b % _LANE == 0, "tile_b must be a multiple of 128 (lane width)"

    grid_b = pl.cdiv(B, tile_b)
    B_out = grid_b * tile_b          # lane-dense padded output, sliced below

    # Tiny parameter reshapes (a few hundred bytes -- negligible HBM traffic).
    b1c = b1.reshape(H, 1).astype(jnp.float32)
    w2c = w2.reshape(1, H).T.astype(jnp.float32)   # (H, 1)
    b2s = b2.reshape(1, 1).astype(jnp.float32)

    # TODO(synk): for very large D (e.g. >=4K fp32 on v7x's 64 MiB VMEM), tile
    # W1/x over D with an fp32 accumulator on an extra 'arbitrary' grid axis
    # and size tile_b so 2*D*tile_b*4 + H*D*4 stays under an explicit
    # vmem_limit_bytes; unnecessary at these sizes.
    out = pl.pallas_call(
        _disc_kernel,
        out_shape=jax.ShapeDtypeStruct((1, B_out), jnp.float32),
        grid=(grid_b,),
        in_specs=[
            pl.BlockSpec((tile_b, D), lambda i: (i, 0)),        # x: one read, no transpose/pad
            pl.BlockSpec((H, D), lambda i: (0, 0)),             # W1 (resident)
            pl.BlockSpec((H, 1), lambda i: (0, 0)),             # b1
            pl.BlockSpec((H, 1), lambda i: (0, 0)),             # W2 column
            pl.BlockSpec(memory_space=pltpu.MemorySpace.SMEM),  # b2 scalar in SMEM
        ],
        out_specs=pl.BlockSpec((1, tile_b), lambda i: (0, i)),  # lane-dense output
        compiler_params=pltpu.CompilerParams(
            dimension_semantics=("parallel",),                  # 2-TC sharding on v7x
        ),
    )(x, w1, b1c, w2c, b2s)

    return out[0, :B].reshape(B, 1)


def init_params(key, input_size):
    """Deterministic init mirroring torch.nn.Linear defaults, torch layout:
    U(-1/sqrt(fan_in), 1/sqrt(fan_in)); W1: (H, D), W2: (1, H)."""
    hidden = input_size // 4
    k1, k2, k3, k4 = jax.random.split(key, 4)

    bound1 = 1.0 / jnp.sqrt(float(input_size))
    w1 = jax.random.uniform(k1, (hidden, input_size), jnp.float32, -bound1, bound1)
    b1 = jax.random.uniform(k2, (hidden,), jnp.float32, -bound1, bound1)

    bound2 = 1.0 / jnp.sqrt(float(hidden))
    w2 = jax.random.uniform(k3, (1, hidden), jnp.float32, -bound2, bound2)
    b2 = jax.random.uniform(k4, (1,), jnp.float32, -bound2, bound2)
    return w1, b1, w2, b2


def _reference(x, w1, b1, w2, b2):
    hp = lax.Precision.HIGHEST
    h = jnp.dot(x, w1.T, precision=hp) + b1
    h = jnp.where(h > 0, h, 0.2 * h)
    return jax.nn.sigmoid(jnp.dot(h, w2.T, precision=hp) + b2)


if __name__ == "__main__":
    key = jax.random.PRNGKey(0)
    k_params, k_x = jax.random.split(key)

    B = 200          # non-multiple of 128: exercises the partial last block
    D = 32           # input_size; hidden = D // 4 = 8

    w1, b1, w2, b2 = init_params(k_params, D)
    x = jax.random.normal(k_x, (B, D), jnp.float32)

    out = discriminator_forward(x, w1, b1, w2, b2)
    out = jax.block_until_ready(out)

    ref = _reference(x, w1, b1, w2, b2)
    assert out.shape == (B, 1), out.shape
    assert jnp.allclose(out, ref, atol=1e-4, rtol=1e-4), (
        f"max abs diff = {jnp.max(jnp.abs(out - ref))}"
    )

    print("KERNEL_OK")
</pallas_src>

<mosaic_0001>
module attributes {stable_mosaic.version = 11 : i64} {
  func.func @_disc_kernel(%arg0: i32, %arg1: memref<128x32xf32, #tpu.memory_space<vmem>>, %arg2: memref<8x32xf32, #tpu.memory_space<vmem>>, %arg3: memref<8x1xf32, #tpu.memory_space<vmem>>, %arg4: memref<8x1xf32, #tpu.memory_space<vmem>>, %arg5: memref<1x1xf32, #tpu.memory_space<smem>>, %arg6: memref<1x128xf32, #tpu.memory_space<vmem>>) attributes {dimension_semantics = [#tpu.dimension_semantics<parallel>], iteration_bounds = array<i64: 2>, scalar_prefetch = 0 : i64, scratch_operands = 0 : i64, tpu.core_type = #tpu.core_type<tc>, window_params = [{transform_indices = @transform_0, window_bounds = array<i64: 128, 32>}, {pipeline_mode = #tpu.pipeline_mode<synchronous>, transform_indices = @transform_1, window_bounds = array<i64: 8, 32>}, {pipeline_mode = #tpu.pipeline_mode<synchronous>, transform_indices = @transform_2, window_bounds = array<i64: 8, 1>}, {pipeline_mode = #tpu.pipeline_mode<synchronous>, transform_indices = @transform_3, window_bounds = array<i64: 8, 1>}, {transform_indices = @transform_4, window_bounds = array<i64: 1, 1>}, {transform_indices = @transform_5, window_bounds = array<i64: 1, 128>}]} {
    %c0 = arith.constant 0 : index
    %c0_0 = arith.constant 0 : index
    %0 = vector.load %arg2[%c0, %c0_0] : memref<8x32xf32, #tpu.memory_space<vmem>>, vector<8x32xf32>
    %c0_1 = arith.constant 0 : index
    %c0_2 = arith.constant 0 : index
    %1 = vector.load %arg1[%c0_1, %c0_2] : memref<128x32xf32, #tpu.memory_space<vmem>>, vector<128x32xf32>
    %cst = arith.constant dense<0.000000e+00> : vector<8x128xf32>
    %2 = tpu.matmul %0, %1, %cst {dimension_numbers = #tpu.dot_dimension_numbers<[1], [1], [0], [0], [0, 0, 1, 0], [], []>} : vector<8x32xf32>, vector<128x32xf32>, vector<8x128xf32> -> vector<8x128xf32>
    %c0_3 = arith.constant 0 : index
    %c0_4 = arith.constant 0 : index
    %3 = vector.load %arg3[%c0_3, %c0_4] : memref<8x1xf32, #tpu.memory_space<vmem>>, vector<8x1xf32>
    %4 = vector.broadcast %3 : vector<8x1xf32> to vector<8x128xf32>
    %5 = arith.addf %2, %4 : vector<8x128xf32>
    %cst_5 = arith.constant 2.000000e-01 : f32
    %6 = vector.broadcast %cst_5 : f32 to vector<8x128xf32>
    %7 = arith.mulf %6, %5 : vector<8x128xf32>
    %8 = arith.maximumf %5, %7 : vector<8x128xf32>
    %c0_6 = arith.constant 0 : index
    %c0_7 = arith.constant 0 : index
    %9 = vector.load %arg4[%c0_6, %c0_7] : memref<8x1xf32, #tpu.memory_space<vmem>>, vector<8x1xf32>
    %10 = vector.broadcast %9 : vector<8x1xf32> to vector<8x128xf32>
    %11 = arith.mulf %8, %10 : vector<8x128xf32>
    %cst_8 = arith.constant dense<0.000000e+00> : vector<128xf32>
    %12 = vector.multi_reduction <add>, %11, %cst_8 [0] : vector<8x128xf32> to vector<128xf32>
    %13 = vector.shape_cast %12 : vector<128xf32> to vector<1x128xf32>
    %c0_9 = arith.constant 0 : index
    %c0_10 = arith.constant 0 : index
    %14 = memref.load %arg5[%c0_9, %c0_10] : memref<1x1xf32, #tpu.memory_space<smem>>
    %15 = vector.broadcast %14 : f32 to vector<1x128xf32>
    %16 = arith.addf %13, %15 : vector<1x128xf32>
    %cst_11 = arith.constant 0.000000e+00 : f32
    %17 = vector.broadcast %cst_11 : f32 to vector<1x128xf32>
    %18 = arith.subf %17, %16 : vector<1x128xf32>
    %19 = math.exp %18 : vector<1x128xf32>
    %cst_12 = arith.constant 1.000000e+00 : f32
    %20 = vector.broadcast %cst_12 : f32 to vector<1x128xf32>
    %21 = arith.addf %20, %19 : vector<1x128xf32>
    %cst_13 = arith.constant 1.000000e+00 : f32
    %22 = vector.broadcast %cst_13 : f32 to vector<1x128xf32>
    %23 = arith.divf %22, %21 : vector<1x128xf32>
    %c0_14 = arith.constant 0 : index
    %c0_15 = arith.constant 0 : index
    %24 = vector.load %arg6[%c0_14, %c0_15] : memref<1x128xf32, #tpu.memory_space<vmem>>, vector<1x128xf32>
    tpu.vector_store %arg6[%c0_14, %c0_15], %23 {strides = array<i32>} : memref<1x128xf32, #tpu.memory_space<vmem>>, vector<1x128xf32>,
    return
  }
  func.func @transform_0(%arg0: i32) -> (i32, i32) {
    %c0_i32 = arith.constant 0 : i32
    %c0_i32_0 = arith.constant 0 : i32
    return %arg0, %c0_i32 : i32, i32
  }
  func.func @transform_1(%arg0: i32) -> (i32, i32) {
    %c0_i32 = arith.constant 0 : i32
    %c0_i32_0 = arith.constant 0 : i32
    %c0_i32_1 = arith.constant 0 : i32
    return %c0_i32, %c0_i32_0 : i32, i32
  }
  func.func @transform_2(%arg0: i32) -> (i32, i32) {
    %c0_i32 = arith.constant 0 : i32
    %c0_i32_0 = arith.constant 0 : i32
    %c0_i32_1 = arith.constant 0 : i32
    return %c0_i32, %c0_i32_0 : i32, i32
  }
  func.func @transform_3(%arg0: i32) -> (i32, i32) {
    %c0_i32 = arith.constant 0 : i32
    %c0_i32_0 = arith.constant 0 : i32
    %c0_i32_1 = arith.constant 0 : i32
    return %c0_i32, %c0_i32_0 : i32, i32
  }
  func.func @transform_4(%arg0: i32) -> (i32, i32) {
    %c0_i32 = arith.constant 0 : i32
    %c0_i32_0 = arith.constant 0 : i32
    %c0_i32_1 = arith.constant 0 : i32
    return %c0_i32, %c0_i32_0 : i32, i32
  }
  func.func @transform_5(%arg0: i32) -> (i32, i32) {
    %c0_i32 = arith.constant 0 : i32
    %c0_i32_0 = arith.constant 0 : i32
    return %c0_i32, %arg0 : i32, i32
  }
}

</mosaic_0001>

<llo_original>
// kernel: discriminator_forward.1
$region0: #{discriminator_forward.1}
  #allocation0 [shape = 'u32[]', space=smem, size = 0x4, offset = 0x4, fixed_abs, tag = 'smem constant byte address 0x4 - core index']
  #allocation1 [shape = 'u32[144,128]{1,0:T(1,128)}', space=vmem, size = 0x12000, scoped, tag = 'internal scratch']
  #allocation2 [shape = 'f32[1,1]{1,0:T(1,128)S(6)}', space=smem, size = 0x200, scoped, tag = 'scoped memory for discriminator_forward.1']
  %s0 = inlined_call_operand.vmem [shape: f32[200,32], index: 0, kind: input, shape index: {}]
  %s1 = inlined_call_operand.vmem [shape: f32[8,32], index: 1, kind: input, shape index: {}]
  %s2 = inlined_call_operand.vmem [shape: f32[8,1], index: 2, kind: input, shape index: {}]
  %s3 = inlined_call_operand.vmem [shape: f32[8,1], index: 3, kind: input, shape index: {}]
  %s4 = inlined_call_operand.<no memory space> [shape: f32[1,1], index: 4, kind: input, shape index: {}]
  %s5 = inlined_call_operand.vmem [shape: f32[1,256], index: 5, kind: output, shape index: {}]
  %s6 = sld [smem:[#allocation0]]
  $region53: #{discriminator_forward.1} parent=0
    _
  %s8 = ssub.s32 1, %s6
  %s9 = scalar_select 0, %s8, %s6
  %10 = sst [smem:[#allocation2]] %s4
  loop: start=0, step=1, limit=4
  $region2: #{discriminator_forward.1} parent=0 // loop_pre_header
    _
  $region3: #{discriminator_forward.1} parent=0 // loop_header
    %s12 = sphi 0, %s16
    %p13 = scmp.ge.s32.totalorder %s12, 4
    %s22 = sphi 0, %s24
    %s25 = sphi 0, %s22
    %s26 = sphi 0, %s25
    %s42 = sphi 0, %s26
    %s46 = sphi 0, %s46
    %s48 = sphi 0, %s46
    %s49 = sphi 0, %s48
    %s63 = sphi 0, %s49
    %s67 = sphi 0, %s67
    %s69 = sphi 0, %s67
    %s70 = sphi 0, %s69
    %s84 = sphi 0, %s70
    %s88 = sphi 0, %s88
    %s90 = sphi 0, %s88
    %s91 = sphi 0, %s90
    %s105 = sphi 0, %s91
    %s109 = sphi 0, %s109
    %s111 = sphi 0, %s109
    %s112 = sphi 0, %s111
    %s126 = sphi 0, %s112
    %s132 = sphi 0, %s134
    %s135 = sphi 0, %s132
    %s136 = sphi 0, %s135
    %s152 = sphi 0, %s136
  $region4: #{discriminator_forward.1} parent=0 // loop_header_branch
    %15 = sbr.rel (%p13) target = $region8
  $region5: #{discriminator_forward.1} parent=0 // loop_body
    %s17 = ssub.s32 %s12, 1
    %s18 = ssub.s32 %s12, 2
    %s19 = sadd.s32 %s12, 1
    %s20 = ssub.s32 %s12, %s19
    %p21 = scmp.eq.s32.totalorder %s20, 0
    %s23 = sadd.s32 %s22, 1
    %s24 = scalar_select %p21, %s22, %s23
    %p27 = pneg %p21
    %p28 = scmp.eq.s32.totalorder %s12, 1
    %p29 = por %p27, %p28
    %p30 = scmp.ne.s32.totalorder %s22, %s25
    %p31 = scmp.eq.s32.totalorder %s12, 0
    %p32 = por %p30, %p31
    %p33 = scmp.ne.s32.totalorder %s22, %s25
    %p34 = scmp.eq.s32.totalorder %s17, 1
    %p35 = por %p33, %p34
    %p36 = scmp.ne.s32.totalorder %s25, %s26
    %p37 = scmp.eq.s32.totalorder %s17, 0
    %p38 = por %p36, %p37
    %p39 = scmp.ne.s32.totalorder %s25, %s26
    %p40 = scmp.eq.s32.totalorder %s18, 1
    %p41 = por %p39, %p40
    %p43 = scmp.ne.s32.totalorder %s26, %s42
    %p44 = scmp.eq.s32.totalorder %s18, 0
    %p45 = por %p43, %p44
    %s47 = sadd.s32 %s46, 1
    %p50 = scmp.eq.s32.totalorder %s12, 1
    %p51 = scmp.ne.s32.totalorder %s46, %s48
    %p52 = scmp.eq.s32.totalorder %s12, 0
    %p53 = por %p51, %p52
    %p54 = scmp.ne.s32.totalorder %s46, %s48
    %p55 = scmp.eq.s32.totalorder %s17, 1
    %p56 = por %p54, %p55
    %p57 = scmp.ne.s32.totalorder %s48, %s49
    %p58 = scmp.eq.s32.totalorder %s17, 0
    %p59 = por %p57, %p58
    %p60 = scmp.ne.s32.totalorder %s48, %s49
    %p61 = scmp.eq.s32.totalorder %s18, 1
    %p62 = por %p60, %p61
    %p64 = scmp.ne.s32.totalorder %s49, %s63
    %p65 = scmp.eq.s32.totalorder %s18, 0
    %p66 = por %p64, %p65
    %s68 = sadd.s32 %s67, 1
    %p71 = scmp.eq.s32.totalorder %s12, 1
    %p72 = scmp.ne.s32.totalorder %s67, %s69
    %p73 = scmp.eq.s32.totalorder %s12, 0
    %p74 = por %p72, %p73
    %p75 = scmp.ne.s32.totalorder %s67, %s69
    %p76 = scmp.eq.s32.totalorder %s17, 1
    %p77 = por %p75, %p76
    %p78 = scmp.ne.s32.totalorder %s69, %s70
    %p79 = scmp.eq.s32.totalorder %s17, 0
    %p80 = por %p78, %p79
    %p81 = scmp.ne.s32.totalorder %s69, %s70
    %p82 = scmp.eq.s32.totalorder %s18, 1
    %p83 = por %p81, %p82
    %p85 = scmp.ne.s32.totalorder %s70, %s84
    %p86 = scmp.eq.s32.totalorder %s18, 0
    %p87 = por %p85, %p86
    %s89 = sadd.s32 %s88, 1
    %p92 = scmp.eq.s32.totalorder %s12, 1
    %p93 = scmp.ne.s32.totalorder %s88, %s90
    %p94 = scmp.eq.s32.totalorder %s12, 0
    %p95 = por %p93, %p94
    %p96 = scmp.ne.s32.totalorder %s88, %s90
    %p97 = scmp.eq.s32.totalorder %s17, 1
    %p98 = por %p96, %p97
    %p99 = scmp.ne.s32.totalorder %s90, %s91
    %p100 = scmp.eq.s32.totalorder %s17, 0
    %p101 = por %p99, %p100
    %p102 = scmp.ne.s32.totalorder %s90, %s91
    %p103 = scmp.eq.s32.totalorder %s18, 1
    %p104 = por %p102, %p103
    %p106 = scmp.ne.s32.totalorder %s91, %s105
    %p107 = scmp.eq.s32.totalorder %s18, 0
    %p108 = por %p106, %p107
    %s110 = sadd.s32 %s109, 1
    %p113 = scmp.eq.s32.totalorder %s12, 1
    %p114 = scmp.ne.s32.totalorder %s109, %s111
    %p115 = scmp.eq.s32.totalorder %s12, 0
    %p116 = por %p114, %p115
    %p117 = scmp.ne.s32.totalorder %s109, %s111
    %p118 = scmp.eq.s32.totalorder %s17, 1
    %p119 = por %p117, %p118
    %p120 = scmp.ne.s32.totalorder %s111, %s112
    %p121 = scmp.eq.s32.totalorder %s17, 0
    %p122 = por %p120, %p121
    %p123 = scmp.ne.s32.totalorder %s111, %s112
    %p124 = scmp.eq.s32.totalorder %s18, 1
    %p125 = por %p123, %p124
    %p127 = scmp.ne.s32.totalorder %s112, %s126
    %p128 = scmp.eq.s32.totalorder %s18, 0
    %p129 = por %p127, %p128
    %s130 = ssub.s32 %s12, %s19
    %p131 = scmp.eq.s32.totalorder %s130, 0
    %s133 = sadd.s32 %s132, 1
    %s134 = scalar_select %p131, %s132, %s133
    %p137 = pneg %p131
    %p138 = scmp.eq.s32.totalorder %s12, 1
    %p139 = por %p137, %p138
    %p140 = scmp.ne.s32.totalorder %s132, %s135
    %p141 = scmp.eq.s32.totalorder %s12, 0
    %p142 = por %p140, %p141
    %p143 = scmp.ne.s32.totalorder %s132, %s135
    %p144 = scmp.eq.s32.totalorder %s17, 1
    %p145 = por %p143, %p144
    %p146 = scmp.ne.s32.totalorder %s135, %s136
    %p147 = scmp.eq.s32.totalorder %s17, 0
    %p148 = por %p146, %p147
    %p149 = scmp.ne.s32.totalorder %s135, %s136
    %p150 = scmp.eq.s32.totalorder %s18, 1
    %p151 = por %p149, %p150
    %p153 = scmp.ne.s32.totalorder %s136, %s152
    %p154 = scmp.eq.s32.totalorder %s18, 0
    %p155 = por %p153, %p154
    %p156 = scmp.le.s32.totalorder 1, %s12
    %p157 = scmp.lt.s32.totalorder %s12, 3
    %p158 = pnand %p156, %p157
    %p159 = pneg %p158
    // Predicated region
    $region9: #{discriminator_forward.1} parent=5 // pred_check
      _
    $region10: #{discriminator_forward.1} parent=5 // pred_check_branch
      %161 = sbr.rel (%p158) target = $region12
    $region11: #{discriminator_forward.1} parent=5 // pred_region
      %s162 = ssub.s32 %s12, 1
      // Predicated region
      $region13: #{discriminator_forward.1} parent=11 // pred_check
        %p163 = pneg %p59
      $region14: #{discriminator_forward.1} parent=11 // pred_check_branch
        %165 = sbr.rel (%p163) target = $region16
      $region15: #{discriminator_forward.1} parent=11 // pred_region
        _
      $region16: #{discriminator_forward.1} parent=11 // pred_fallthru
        _
      // Predicated region
      $region17: #{discriminator_forward.1} parent=11 // pred_check
        %p166 = pneg %p80
      $region18: #{discriminator_forward.1} parent=11 // pred_check_branch
        %168 = sbr.rel (%p166) target = $region20
      $region19: #{discriminator_forward.1} parent=11 // pred_region
        _
      $region20: #{discriminator_forward.1} parent=11 // pred_fallthru
        _
      // Predicated region
      $region21: #{discriminator_forward.1} parent=11 // pred_check
        %p169 = pneg %p101
      $region22: #{discriminator_forward.1} parent=11 // pred_check_branch
        %171 = sbr.rel (%p169) target = $region24
      $region23: #{discriminator_forward.1} parent=11 // pred_region
        _
      $region24: #{discriminator_forward.1} parent=11 // pred_fallthru
        _
      // Predicated region
      $region25: #{discriminator_forward.1} parent=11 // pred_check
        %p172 = pneg %p122
      $region26: #{discriminator_forward.1} parent=11 // pred_check_branch
        %174 = sbr.rel (%p172) target = $region28
      $region27: #{discriminator_forward.1} parent=11 // pred_region
        _
      $region28: #{discriminator_forward.1} parent=11 // pred_fallthru
        _
    $region12: #{discriminator_forward.1} parent=5 // pred_fallthru
      _
    %p175 = scmp.lt.s32.totalorder %s12, 2
    // Predicated region
    $region29: #{discriminator_forward.1} parent=5 // pred_check
      %p176 = pneg %p175
    $region30: #{discriminator_forward.1} parent=5 // pred_check_branch
      %178 = sbr.rel (%p176) target = $region32
    $region31: #{discriminator_forward.1} parent=5 // pred_region
      // Predicated region
      $region33: #{discriminator_forward.1} parent=31 // pred_check
        %p179 = pneg %p32
      $region34: #{discriminator_forward.1} parent=31 // pred_check_branch
        %181 = sbr.rel (%p179) target = $region36
      $region35: #{discriminator_forward.1} parent=31 // pred_region
        %s182 = smul.u32 16, %s12
        %s183 = ssub.s32 25, %s182
        %p184 = scmp.lt.s32.totalorder %s183, 16
        %s185 = scalar_select %p184, %s183, 16
        %s186 = smul.u32 128, %s185
        %p187 = scmp.lt.s32.totalorder %s182, 24
        %s188 = scalar_select %p187, %s182, 24
        %s189 = smul.addr %s188, 8
        %s190 = scalar_lea.vmem %s0, %s189
        %s191 = smul.u32 16, %s12
        %s192 = ssub.s32 25, %s191
        %p193 = scmp.lt.s32.totalorder %s192, 16
        %s194 = scalar_select %p193, %s192, 16
        %s195 = smul.u32 128, %s194
      $region36: #{discriminator_forward.1} parent=31 // pred_fallthru
        _
    $region32: #{discriminator_forward.1} parent=5 // pred_fallthru
      _
    %p196 = scmp.le.s32.totalorder 1, %s12
    %p197 = scmp.lt.s32.totalorder %s12, 3
    %p198 = pnand %p196, %p197
    %p199 = pneg %p198
    // Predicated region
    $region37: #{discriminator_forward.1} parent=5 // pred_check
      _
    $region38: #{discriminator_forward.1} parent=5 // pred_check_branch
      %201 = sbr.rel (%p198) target = $region40
    $region39: #{discriminator_forward.1} parent=5 // pred_region
      %s202 = ssub.s32 %s12, 1
      %s203 = smul.u32 16, %s17
      %s204 = ssub.s32 25, %s203
      %p205 = scmp.lt.s32.totalorder %s204, 16
      %s206 = scalar_select %p205, %s204, 16
      %s207 = smul.u32 128, %s206
      %p208 = scmp.lt.s32.totalorder %s203, 24
      %s209 = scalar_select %p208, %s203, 24
      %s210 = smul.addr %s209, 8
      %s211 = scalar_lea.vmem %s0, %s210
      %p212 = pneg %p38
      %p213 = pneg %p35
      %p214 = pneg %p59
      %p215 = pneg %p56
      %p216 = pneg %p80
      %p217 = pneg %p77
      %p218 = pneg %p101
      %p219 = pneg %p98
      %p220 = pneg %p122
      %p221 = pneg %p119
      %p222 = pneg %p148
      %p223 = pneg %p145
      %p224 = scmp.lt.s32.totalorder %s17, 1
      %s225 = scalar_select %p224, %s17, 1
      %s226 = scalar_lea.vmem %s5, %s225
      %s227 = smul.u32 16, %s17
      %s228 = ssub.s32 25, %s227
      %p229 = scmp.lt.s32.totalorder %s228, 16
      %s230 = scalar_select %p229, %s228, 16
      %s231 = smul.u32 128, %s230
      %p232 = scmp.lt.s32.totalorder %s227, 24
      %s233 = scalar_select %p232, %s227, 24
      %s234 = smul.addr %s233, 8
      %s235 = scalar_lea.vmem %s0, %s234
      %s236 = smul.u32 16, %s17
      %s237 = ssub.s32 25, %s236
      %p238 = scmp.lt.s32.totalorder %s237, 16
      %s239 = scalar_select %p238, %s237, 16
      %s240 = smul.u32 128, %s239
      %p241 = scmp.lt.s32.totalorder %s17, 1
      %s242 = scalar_select %p241, %s17, 1
      %s243 = scalar_lea.vmem %s5, %s242
      %v244 = vld [vmem:[%s1] sm:$0xff]
      %v245 = vld [vmem:[%s235] sm:$0xff]
      %v246 = vld [vmem:[%s235 + $0x8] sm:$0xff]
      %v247 = vld [vmem:[%s235 + $0x10] sm:$0xff]
      %v248 = vld [vmem:[%s235 + $0x18] sm:$0xff]
      %v249 = vld [vmem:[%s235 + $0x20] sm:$0xff]
      %v250 = vld [vmem:[%s235 + $0x28] sm:$0xff]
      %v251 = vld [vmem:[%s235 + $0x30] sm:$0xff]
      %v252 = vld [vmem:[%s235 + $0x38] sm:$0xff]
      %v253 = vld [vmem:[%s235 + $0x40] sm:$0xff]
      %v254 = vld [vmem:[%s235 + $0x48] sm:$0xff]
      %v255 = vld [vmem:[%s235 + $0x50] sm:$0xff]
      %v256 = vld [vmem:[%s235 + $0x58] sm:$0xff]
      %v257 = vld [vmem:[%s235 + $0x60] sm:$0xff]
      %v258 = vld [vmem:[%s235 + $0x68] sm:$0xff]
      %v259 = vld [vmem:[%s235 + $0x70] sm:$0xff]
      %v260 = vld [vmem:[%s235 + $0x78] sm:$0xff]
      %v261 = vld [vmem:[%s2] sm:$0xff]
      %263 = vset.pattern.permute.xlu0 0
      %264 = vperm.xlu0 %263, %v261
      %v265 = vpop.permute.xlu0 %264
      %vm267 = vcmask 261120
      %v269 = vsel %vm267, %v244, 0
      %v272 = vsel %vm267, %v245, 0
      %v275 = vsel %vm267, %v246, 0
      %v278 = vsel %vm267, %v247, 0
      %v281 = vsel %vm267, %v248, 0
      %v284 = vsel %vm267, %v249, 0
      %v287 = vsel %vm267, %v250, 0
      %v290 = vsel %vm267, %v251, 0
      %v293 = vsel %vm267, %v252, 0
      %v296 = vsel %vm267, %v253, 0
      %v299 = vsel %vm267, %v254, 0
      %v302 = vsel %vm267, %v255, 0
      %v305 = vsel %vm267, %v256, 0
      %v308 = vsel %vm267, %v257, 0
      %v311 = vsel %vm267, %v258, 0
      %v314 = vsel %vm267, %v259, 0
      %v317 = vsel %vm267, %v260, 0
      %319 = vmatprep.subr.mxu0 0.0
      %320 = vmatpush1.xpose.msra.mxu0 %v317
      %321 = vmatprep.subr.mxu0 0.0
      %322 = vmatpush1.xpose.msra.mxu0 %v314
      %323 = vmatprep.subr.mxu0 0.0
      %324 = vmatpush1.xpose.msra.mxu0 %v311
      %325 = vmatprep.subr.mxu0 0.0
      %326 = vmatpush1.xpose.msra.mxu0 %v308
      %327 = vmatprep.subr.mxu0 0.0
      %328 = vmatpush1.xpose.msra.mxu0 %v305
      %329 = vmatprep.subr.mxu0 0.0
      %330 = vmatpush1.xpose.msra.mxu0 %v302
      %331 = vmatprep.subr.mxu0 0.0
      %332 = vmatpush1.xpose.msra.mxu0 %v299
      %333 = vmatprep.subr.mxu0 0.0
      %334 = vmatpush1.xpose.msra.mxu0 %v296
      %335 = vmatprep.subr.mxu0 0.0
      %336 = vmatpush1.xpose.msra.mxu0 %v293
      %337 = vmatprep.subr.mxu0 0.0
      %338 = vmatpush1.xpose.msra.mxu0 %v290
      %339 = vmatprep.subr.mxu0 0.0
      %340 = vmatpush1.xpose.msra.mxu0 %v287
      %341 = vmatprep.subr.mxu0 0.0
      %342 = vmatpush1.xpose.msra.mxu0 %v284
      %343 = vmatprep.subr.mxu0 0.0
      %344 = vmatpush1.xpose.msra.mxu0 %v281
      %345 = vmatprep.subr.mxu0 0.0
      %346 = vmatpush1.xpose.msra.mxu0 %v278
      %347 = vmatprep.subr.mxu0 0.0
      %348 = vmatpush1.xpose.msra.mxu0 %v275
      %349 = vmatprep.subr.mxu0 0.0
      %350 = vmatpush1.xpose.msra.mxu0 %v272
      %351 = vmatprep.subr.mxu0 0.0
      %352 = vmatpush2.xpose.msra.mxu0 0.0
      %353 = vmatprep.subr.mxu0 0.0
      %354 = vmatpush2.xpose.msra.mxu0 0.0
      %355 = vmatprep.subr.mxu0 0.0
      %356 = vmatpush2.xpose.msra.mxu0 0.0
      %357 = vmatprep.subr.mxu0 0.0
      %358 = vmatpush2.xpose.msra.mxu0 0.0
      %359 = vmatprep.subr.mxu0 0.0
      %360 = vmatpush2.xpose.msra.mxu0 0.0
      %361 = vmatprep.subr.mxu0 0.0
      %362 = vmatpush2.xpose.msra.mxu0 0.0
      %363 = vmatprep.subr.mxu0 0.0
      %364 = vmatpush2.xpose.msra.mxu0 0.0
      %365 = vmatprep.subr.mxu0 0.0
      %366 = vmatpush2.xpose.msra.mxu0 0.0
      %367 = vmatprep.subr.mxu0 0.0
      %368 = vmatpush2.xpose.msra.mxu0 0.0
      %369 = vmatprep.subr.mxu0 0.0
      %370 = vmatpush2.xpose.msra.mxu0 0.0
      %371 = vmatprep.subr.mxu0 0.0
      %372 = vmatpush2.xpose.msra.mxu0 0.0
      %373 = vmatprep.subr.mxu0 0.0
      %374 = vmatpush2.xpose.msra.mxu0 0.0
      %375 = vmatprep.subr.mxu0 0.0
      %376 = vmatpush2.xpose.msra.mxu0 0.0
      %377 = vmatprep.subr.mxu0 0.0
      %378 = vmatpush2.xpose.msra.mxu0 0.0
      %379 = vmatprep.subr.mxu0 0.0
      %380 = vmatpush2.xpose.msra.mxu0 0.0
      %381 = vmatprep.subr.mxu0 0.0
      %382 = vmatpush2.xpose.msra.mxu0 0.0
      %383 = vmatprep.mubr.f32.mxu0 0.0
      %384 = vmatmul.mubr.f32.gmra.mxu0 %v269
      %v385 = vpop.f32.mrf.mxu0
      %v386 = vadd.f32 %v265, %v385
      %v387 = vpop.f32.mrf.mxu0
      %388 = vdwg.mxu0
      %v389 = vmul.f32 %v386, 0.2
      %v390 = vmax.f32 %v386, %v389
      %v391 = vld [vmem:[%s3] sm:$0xff]
      %393 = vset.pattern.permute.xlu0 0
      %394 = vperm.xlu0 %393, %v391
      %v395 = vpop.permute.xlu0 %394
      %v397 = vmul.f32 %v390, %v395
      %v398 = vrot.slane %v397, 4
      %v399 = vadd.f32 %v397, %v398
      %v400 = vrot.slane %v399, 2
      %v401 = vadd.f32 %v399, %v400
      %v402 = vrot.slane %v401, 1
      %v403 = vadd.f32 %v401, %v402
      %s404 = sld [smem:[#allocation2]]
      %v405 = vstv %s404
      %v406 = vadd.f32 %v403, %v405
      %v407 = vsub.f32 0.0, %v406
      %v408 = vmul.f32 %v407, 1.442695
      %v409 = vpow.pop %v408
      %v410 = vadd.f32 %v409, 1.0
      %v411 = vrcp.pop %v410
      %v412 = vmul.f32 1.0, %v411
      %413 = vst [vmem:[%s243] sm:$0x1] %v412
      %p414 = scmp.lt.s32.totalorder %s17, 1
      %s415 = scalar_select %p414, %s17, 1
      %s416 = scalar_lea.vmem %s5, %s415
      // Predicated region
      $region41: #{discriminator_forward.1} parent=39 // pred_check
        %p417 = pneg %p145
      $region42: #{discriminator_forward.1} parent=39 // pred_check_branch
        %419 = sbr.rel (%p417) target = $region44
      $region43: #{discriminator_forward.1} parent=39 // pred_region
        _
      $region44: #{discriminator_forward.1} parent=39 // pred_fallthru
        _
    $region40: #{discriminator_forward.1} parent=5 // pred_fallthru
      _
    %p420 = scmp.le.s32.totalorder 2, %s12
    // Predicated region
    $region45: #{discriminator_forward.1} parent=5 // pred_check
      %p421 = pneg %p420
    $region46: #{discriminator_forward.1} parent=5 // pred_check_branch
      %423 = sbr.rel (%p421) target = $region48
    $region47: #{discriminator_forward.1} parent=5 // pred_region
      %s424 = ssub.s32 %s12, 2
      // Predicated region
      $region49: #{discriminator_forward.1} parent=47 // pred_check
        %p425 = pneg %p151
      $region50: #{discriminator_forward.1} parent=47 // pred_check_branch
        %427 = sbr.rel (%p425) target = $region52
      $region51: #{discriminator_forward.1} parent=47 // pred_region
        %p428 = scmp.lt.s32.totalorder %s18, 1
        %s429 = scalar_select %p428, %s18, 1
        %s430 = scalar_lea.vmem %s5, %s429
      $region52: #{discriminator_forward.1} parent=47 // pred_fallthru
        _
    $region48: #{discriminator_forward.1} parent=5 // pred_fallthru
      _
  $region6: #{discriminator_forward.1} parent=0 // loop_footer
    %s16 = sadd.s32 1, %s12
  $region7: #{discriminator_forward.1} parent=0 // loop_footer_branch
    %11 = sbr.rel target = $region3
  $region8: #{discriminator_forward.1} parent=0 // loop_exit
    _

</llo_original>
